<compile_context>
chip_gen: v5e
topology: v5e:2x2
jax: 0.10.0
libtpu: 0.0.40
codegen_flags: <defaults>
</compile_context>

<pallas_src>
import jax
import jax.numpy as jnp
from jax.experimental import pallas as pl
from jax.experimental.pallas import tpu as pltpu

INPUT_SIZE = 13
NUM_CONDITIONS = 3
OUTPUT_SIZE = 5
H1, H2, H3 = 128, 64, 32
PACKED_IN = INPUT_SIZE + NUM_CONDITIONS  # 16: [x | cond] packed along lanes


def _silu(x):
    return x * jax.nn.sigmoid(x)


def _round_up(n, m):
    return ((n + m - 1) // m) * m


def _bpnn_kernel(xin_ref, w1_ref, b1_ref, w2_ref, b2_ref, w3_ref, b3_ref,
                 w4_ref, b4_ref, out_ref):
    w1 = w1_ref[...]
    wdt = w1.dtype                                    # bf16 (fast path) or f32
    xin = xin_ref[...].astype(wdt)                    # (TB, 16) = [x | cond]

    # Fused first layer + condition projection:
    #   W1_ext (16, 133): [:13, :128] = backbone W1, [13:, 128:133] = Wc
    #   b1_ext (1, 133)  = [b1 | bc]
    h = jnp.dot(xin, w1, preferred_element_type=jnp.float32) + b1_ref[...]
    gate_pre = h[:, H1:H1 + OUTPUT_SIZE]              # (TB, 5)  = cond @ Wc + bc
    h1 = _silu(h[:, :H1])                             # (TB, 128), f32

    # backbone: Linear -> SiLU -> [Dropout] x3 -> Linear(32, 5)
    h2 = _silu(jnp.dot(h1.astype(wdt), w2_ref[...],
                       preferred_element_type=jnp.float32) + b2_ref[...])
    h3 = _silu(jnp.dot(h2.astype(wdt), w3_ref[...],
                       preferred_element_type=jnp.float32) + b3_ref[...])
    main = (jnp.dot(h3.astype(wdt), w4_ref[...],
                    preferred_element_type=jnp.float32) + b4_ref[...])  # (TB, 5)

    # Dropout(0.2) is identity at inference; element-wise math stays f32.
    out_ref[...] = main * (1.0 + jax.nn.sigmoid(gate_pre))


def _pack_params(params, use_bf16):
    """Pack PyTorch-style params into the fused kernel layout."""
    (w1, b1, w2, b2, w3, b3, w4, b4, wc, bc) = params
    wdt = jnp.bfloat16 if use_bf16 else jnp.float32

    # Block-diagonal extended first-layer weight: fuses the cond projection.
    w1e = jnp.zeros((PACKED_IN, H1 + OUTPUT_SIZE), jnp.float32)
    w1e = w1e.at[:INPUT_SIZE, :H1].set(w1)
    w1e = w1e.at[INPUT_SIZE:, H1:].set(wc)
    b1e = jnp.concatenate([b1, bc], axis=-1)          # (1, 133), kept f32

    return (w1e.astype(wdt), b1e.astype(jnp.float32),
            w2.astype(wdt), b2.astype(jnp.float32),
            w3.astype(wdt), b3.astype(jnp.float32),
            w4.astype(wdt), b4.astype(jnp.float32))


def condition_weighted_bpnn(x, cond, params, *, tile_b=None, use_bf16=True):
    B = x.shape[0]
    xin = jnp.concatenate([x, cond], axis=-1).astype(jnp.float32)  # (B, 16)

    if tile_b is None:
        # Big tiles amortize the ~0.35us/step pipeline overhead; keep >=2 grid
        # steps (when B allows) so the "parallel" axis shards over both v7x TCs.
        tile_b = min(1024, _round_up(max(pl.cdiv(B, 2), 8), 8))
    tile_b = _round_up(min(tile_b, _round_up(B, 8)), 8)

    grid_b = pl.cdiv(B, tile_b)
    Bp = grid_b * tile_b
    if Bp != B:
        xin = jnp.pad(xin, ((0, Bp - B), (0, 0)))     # tail rows are dummy work

    (w1e, b1e, w2, b2, w3, b3, w4, b4) = _pack_params(params, use_bf16)

    def resident(arr):
        # Weights/biases: single full block, same index every grid step
        # (stays resident in VMEM, DMA'd once).
        return pl.BlockSpec(arr.shape, lambda i: (0, 0))

    out = pl.pallas_call(
        _bpnn_kernel,
        out_shape=jax.ShapeDtypeStruct((Bp, OUTPUT_SIZE), jnp.float32),
        grid_spec=pltpu.PrefetchScalarGridSpec(
            num_scalar_prefetch=0,
            grid=(grid_b,),
            in_specs=[
                pl.BlockSpec((tile_b, PACKED_IN), lambda i: (i, 0)),
                resident(w1e), resident(b1e),
                resident(w2), resident(b2),
                resident(w3), resident(b3),
                resident(w4), resident(b4),
            ],
            out_specs=pl.BlockSpec((tile_b, OUTPUT_SIZE), lambda i: (i, 0)),
        ),
        compiler_params=pltpu.CompilerParams(
            dimension_semantics=("parallel",)),
    )(xin, w1e, b1e, w2, b2, w3, b3, w4, b4)
    return out[:B]


def init_params(key):
    """Deterministic synthetic parameters. Linear weights stored (in, out);
    biases stored (1, out) so they broadcast cleanly inside the kernel."""
    def linear(key, fan_in, fan_out):
        kw, kb = jax.random.split(key)
        bound = 1.0 / jnp.sqrt(fan_in)
        w = jax.random.uniform(kw, (fan_in, fan_out), jnp.float32, -bound, bound)
        b = jax.random.uniform(kb, (1, fan_out), jnp.float32, -bound, bound)
        return w, b

    keys = jax.random.split(key, 5)
    w1, b1 = linear(keys[0], INPUT_SIZE, H1)
    w2, b2 = linear(keys[1], H1, H2)
    w3, b3 = linear(keys[2], H2, H3)
    w4, b4 = linear(keys[3], H3, OUTPUT_SIZE)
    wc, bc = linear(keys[4], NUM_CONDITIONS, OUTPUT_SIZE)
    return (w1, b1, w2, b2, w3, b3, w4, b4, wc, bc)


def reference_forward(x, cond, params):
    (w1, b1, w2, b2, w3, b3, w4, b4, wc, bc) = params
    h = _silu(x @ w1 + b1)
    h = _silu(h @ w2 + b2)
    h = _silu(h @ w3 + b3)
    main = h @ w4 + b4
    weights = jax.nn.sigmoid(cond @ wc + bc)
    return main * (1.0 + weights)


if __name__ == "__main__":
    key = jax.random.PRNGKey(0)
    kx, kc, kp = jax.random.split(key, 3)

    # Small batch, deliberately NOT a multiple of 8 to exercise the padding /
    # remainder handling and the >=2-step grid selection (tile_b=56, 2 steps).
    B = 100
    x = jax.random.normal(kx, (B, INPUT_SIZE), jnp.float32)
    cond = jax.random.normal(kc, (B, NUM_CONDITIONS), jnp.float32)
    params = init_params(kp)

    ref = reference_forward(x, cond, params)

    # f32 MXU-operand path: tight check against the pure-JAX reference.
    out_f32 = jax.block_until_ready(
        condition_weighted_bpnn(x, cond, params, use_bf16=False))
    assert out_f32.shape == (B, OUTPUT_SIZE)
    assert jnp.allclose(out_f32, ref, atol=1e-3, rtol=1e-3), \
        float(jnp.max(jnp.abs(out_f32 - ref)))

    # bf16 MXU-operand path (default fast path on v6e/v7x): loose check.
    out_bf16 = jax.block_until_ready(condition_weighted_bpnn(x, cond, params))
    assert out_bf16.shape == (B, OUTPUT_SIZE)
    assert jnp.allclose(out_bf16, ref, atol=5e-2, rtol=5e-2), \
        float(jnp.max(jnp.abs(out_bf16 - ref)))

    print("KERNEL_OK")
</pallas_src>

<mosaic_0001>
module attributes {stable_mosaic.version = 11 : i64} {
  func.func @_bpnn_kernel(%arg0: i32, %arg1: memref<56x16xf32, #tpu.memory_space<vmem>>, %arg2: memref<16x133xf32, #tpu.memory_space<vmem>>, %arg3: memref<1x133xf32, #tpu.memory_space<vmem>>, %arg4: memref<128x64xf32, #tpu.memory_space<vmem>>, %arg5: memref<1x64xf32, #tpu.memory_space<vmem>>, %arg6: memref<64x32xf32, #tpu.memory_space<vmem>>, %arg7: memref<1x32xf32, #tpu.memory_space<vmem>>, %arg8: memref<32x5xf32, #tpu.memory_space<vmem>>, %arg9: memref<1x5xf32, #tpu.memory_space<vmem>>, %arg10: memref<56x5xf32, #tpu.memory_space<vmem>>) attributes {dimension_semantics = [#tpu.dimension_semantics<parallel>], iteration_bounds = array<i64: 2>, scalar_prefetch = 0 : i64, scratch_operands = 0 : i64, tpu.core_type = #tpu.core_type<tc>, window_params = [{transform_indices = @transform_0, window_bounds = array<i64: 56, 16>}, {pipeline_mode = #tpu.pipeline_mode<synchronous>, transform_indices = @transform_1, window_bounds = array<i64: 16, 133>}, {pipeline_mode = #tpu.pipeline_mode<synchronous>, transform_indices = @transform_2, window_bounds = array<i64: 1, 133>}, {pipeline_mode = #tpu.pipeline_mode<synchronous>, transform_indices = @transform_3, window_bounds = array<i64: 128, 64>}, {pipeline_mode = #tpu.pipeline_mode<synchronous>, transform_indices = @transform_4, window_bounds = array<i64: 1, 64>}, {pipeline_mode = #tpu.pipeline_mode<synchronous>, transform_indices = @transform_5, window_bounds = array<i64: 64, 32>}, {pipeline_mode = #tpu.pipeline_mode<synchronous>, transform_indices = @transform_6, window_bounds = array<i64: 1, 32>}, {pipeline_mode = #tpu.pipeline_mode<synchronous>, transform_indices = @transform_7, window_bounds = array<i64: 32, 5>}, {pipeline_mode = #tpu.pipeline_mode<synchronous>, transform_indices = @transform_8, window_bounds = array<i64: 1, 5>}, {transform_indices = @transform_9, window_bounds = array<i64: 56, 5>}]} {
    %c0 = arith.constant 0 : index
    %c0_0 = arith.constant 0 : index
    %0 = vector.load %arg2[%c0, %c0_0] : memref<16x133xf32, #tpu.memory_space<vmem>>, vector<16x133xf32>
    %c0_1 = arith.constant 0 : index
    %c0_2 = arith.constant 0 : index
    %1 = vector.load %arg1[%c0_1, %c0_2] : memref<56x16xf32, #tpu.memory_space<vmem>>, vector<56x16xf32>
    %cst = arith.constant dense<0.000000e+00> : vector<56x133xf32>
    %2 = tpu.matmul %1, %0, %cst {dimension_numbers = #tpu.dot_dimension_numbers<[1], [0], [0], [1], [0, 0, 1, 1], [], []>} : vector<56x16xf32>, vector<16x133xf32>, vector<56x133xf32> -> vector<56x133xf32>
    %c0_3 = arith.constant 0 : index
    %c0_4 = arith.constant 0 : index
    %3 = vector.load %arg3[%c0_3, %c0_4] : memref<1x133xf32, #tpu.memory_space<vmem>>, vector<1x133xf32>
    %4 = vector.broadcast %3 : vector<1x133xf32> to vector<56x133xf32>
    %5 = arith.addf %2, %4 : vector<56x133xf32>
    %6 = vector.extract_strided_slice %5 {offsets = [0, 128], sizes = [56, 5], strides = [1, 1]} : vector<56x133xf32> to vector<56x5xf32>
    %7 = vector.extract_strided_slice %5 {offsets = [0, 0], sizes = [56, 128], strides = [1, 1]} : vector<56x133xf32> to vector<56x128xf32>
    %8 = arith.negf %7 : vector<56x128xf32>
    %9 = math.exp %8 : vector<56x128xf32>
    %cst_5 = arith.constant 1.000000e+00 : f32
    %10 = vector.broadcast %cst_5 : f32 to vector<56x128xf32>
    %11 = arith.addf %10, %9 : vector<56x128xf32>
    %12 = arith.divf %10, %11 : vector<56x128xf32>
    %13 = arith.mulf %7, %12 : vector<56x128xf32>
    %c0_6 = arith.constant 0 : index
    %c0_7 = arith.constant 0 : index
    %14 = vector.load %arg4[%c0_6, %c0_7] : memref<128x64xf32, #tpu.memory_space<vmem>>, vector<128x64xf32>
    %cst_8 = arith.constant dense<0.000000e+00> : vector<56x64xf32>
    %15 = tpu.matmul %13, %14, %cst_8 {dimension_numbers = #tpu.dot_dimension_numbers<[1], [0], [0], [1], [0, 0, 1, 1], [], []>} : vector<56x128xf32>, vector<128x64xf32>, vector<56x64xf32> -> vector<56x64xf32>
    %c0_9 = arith.constant 0 : index
    %c0_10 = arith.constant 0 : index
    %16 = vector.load %arg5[%c0_9, %c0_10] : memref<1x64xf32, #tpu.memory_space<vmem>>, vector<1x64xf32>
    %17 = vector.broadcast %16 : vector<1x64xf32> to vector<56x64xf32>
    %18 = arith.addf %15, %17 : vector<56x64xf32>
    %19 = arith.negf %18 : vector<56x64xf32>
    %20 = math.exp %19 : vector<56x64xf32>
    %cst_11 = arith.constant 1.000000e+00 : f32
    %21 = vector.broadcast %cst_11 : f32 to vector<56x64xf32>
    %22 = arith.addf %21, %20 : vector<56x64xf32>
    %23 = arith.divf %21, %22 : vector<56x64xf32>
    %24 = arith.mulf %18, %23 : vector<56x64xf32>
    %c0_12 = arith.constant 0 : index
    %c0_13 = arith.constant 0 : index
    %25 = vector.load %arg6[%c0_12, %c0_13] : memref<64x32xf32, #tpu.memory_space<vmem>>, vector<64x32xf32>
    %cst_14 = arith.constant dense<0.000000e+00> : vector<56x32xf32>
    %26 = tpu.matmul %24, %25, %cst_14 {dimension_numbers = #tpu.dot_dimension_numbers<[1], [0], [0], [1], [0, 0, 1, 1], [], []>} : vector<56x64xf32>, vector<64x32xf32>, vector<56x32xf32> -> vector<56x32xf32>
    %c0_15 = arith.constant 0 : index
    %c0_16 = arith.constant 0 : index
    %27 = vector.load %arg7[%c0_15, %c0_16] : memref<1x32xf32, #tpu.memory_space<vmem>>, vector<1x32xf32>
    %28 = vector.broadcast %27 : vector<1x32xf32> to vector<56x32xf32>
    %29 = arith.addf %26, %28 : vector<56x32xf32>
    %30 = arith.negf %29 : vector<56x32xf32>
    %31 = math.exp %30 : vector<56x32xf32>
    %cst_17 = arith.constant 1.000000e+00 : f32
    %32 = vector.broadcast %cst_17 : f32 to vector<56x32xf32>
    %33 = arith.addf %32, %31 : vector<56x32xf32>
    %34 = arith.divf %32, %33 : vector<56x32xf32>
    %35 = arith.mulf %29, %34 : vector<56x32xf32>
    %c0_18 = arith.constant 0 : index
    %c0_19 = arith.constant 0 : index
    %36 = vector.load %arg8[%c0_18, %c0_19] : memref<32x5xf32, #tpu.memory_space<vmem>>, vector<32x5xf32>
    %cst_20 = arith.constant dense<0.000000e+00> : vector<56x5xf32>
    %37 = tpu.matmul %35, %36, %cst_20 {dimension_numbers = #tpu.dot_dimension_numbers<[1], [0], [0], [1], [0, 0, 1, 1], [], []>} : vector<56x32xf32>, vector<32x5xf32>, vector<56x5xf32> -> vector<56x5xf32>
    %c0_21 = arith.constant 0 : index
    %c0_22 = arith.constant 0 : index
    %38 = vector.load %arg9[%c0_21, %c0_22] : memref<1x5xf32, #tpu.memory_space<vmem>>, vector<1x5xf32>
    %39 = vector.broadcast %38 : vector<1x5xf32> to vector<56x5xf32>
    %40 = arith.addf %37, %39 : vector<56x5xf32>
    %41 = arith.negf %6 : vector<56x5xf32>
    %42 = math.exp %41 : vector<56x5xf32>
    %cst_23 = arith.constant 1.000000e+00 : f32
    %43 = vector.broadcast %cst_23 : f32 to vector<56x5xf32>
    %44 = arith.addf %43, %42 : vector<56x5xf32>
    %45 = arith.divf %43, %44 : vector<56x5xf32>
    %cst_24 = arith.constant 1.000000e+00 : f32
    %46 = vector.broadcast %cst_24 : f32 to vector<56x5xf32>
    %47 = arith.addf %46, %45 : vector<56x5xf32>
    %48 = arith.mulf %40, %47 : vector<56x5xf32>
    %c0_25 = arith.constant 0 : index
    %c0_26 = arith.constant 0 : index
    %49 = vector.load %arg10[%c0_25, %c0_26] : memref<56x5xf32, #tpu.memory_space<vmem>>, vector<56x5xf32>
    tpu.vector_store %arg10[%c0_25, %c0_26], %48 {strides = array<i32>} : memref<56x5xf32, #tpu.memory_space<vmem>>, vector<56x5xf32>,
    return
  }
  func.func @transform_0(%arg0: i32) -> (i32, i32) {
    %c0_i32 = arith.constant 0 : i32
    %c0_i32_0 = arith.constant 0 : i32
    return %arg0, %c0_i32 : i32, i32
  }
  func.func @transform_1(%arg0: i32) -> (i32, i32) {
    %c0_i32 = arith.constant 0 : i32
    %c0_i32_0 = arith.constant 0 : i32
    %c0_i32_1 = arith.constant 0 : i32
    return %c0_i32, %c0_i32_0 : i32, i32
  }
  func.func @transform_2(%arg0: i32) -> (i32, i32) {
    %c0_i32 = arith.constant 0 : i32
    %c0_i32_0 = arith.constant 0 : i32
    %c0_i32_1 = arith.constant 0 : i32
    return %c0_i32, %c0_i32_0 : i32, i32
  }
  func.func @transform_3(%arg0: i32) -> (i32, i32) {
    %c0_i32 = arith.constant 0 : i32
    %c0_i32_0 = arith.constant 0 : i32
    %c0_i32_1 = arith.constant 0 : i32
    return %c0_i32, %c0_i32_0 : i32, i32
  }
  func.func @transform_4(%arg0: i32) -> (i32, i32) {
    %c0_i32 = arith.constant 0 : i32
    %c0_i32_0 = arith.constant 0 : i32
    %c0_i32_1 = arith.constant 0 : i32
    return %c0_i32, %c0_i32_0 : i32, i32
  }
  func.func @transform_5(%arg0: i32) -> (i32, i32) {
    %c0_i32 = arith.constant 0 : i32
    %c0_i32_0 = arith.constant 0 : i32
    %c0_i32_1 = arith.constant 0 : i32
    return %c0_i32, %c0_i32_0 : i32, i32
  }
  func.func @transform_6(%arg0: i32) -> (i32, i32) {
    %c0_i32 = arith.constant 0 : i32
    %c0_i32_0 = arith.constant 0 : i32
    %c0_i32_1 = arith.constant 0 : i32
    return %c0_i32, %c0_i32_0 : i32, i32
  }
  func.func @transform_7(%arg0: i32) -> (i32, i32) {
    %c0_i32 = arith.constant 0 : i32
    %c0_i32_0 = arith.constant 0 : i32
    %c0_i32_1 = arith.constant 0 : i32
    return %c0_i32, %c0_i32_0 : i32, i32
  }
  func.func @transform_8(%arg0: i32) -> (i32, i32) {
    %c0_i32 = arith.constant 0 : i32
    %c0_i32_0 = arith.constant 0 : i32
    %c0_i32_1 = arith.constant 0 : i32
    return %c0_i32, %c0_i32_0 : i32, i32
  }
  func.func @transform_9(%arg0: i32) -> (i32, i32) {
    %c0_i32 = arith.constant 0 : i32
    %c0_i32_0 = arith.constant 0 : i32
    return %arg0, %c0_i32 : i32, i32
  }
}

</mosaic_0001>

<llo_original>
// kernel: tpu_custom_call.1
$region0: #{tpu_custom_call.1}
  #allocation0 [shape = 'u32[]', space=smem, size = 0x4, offset = 0x4, fixed_abs, tag = 'smem constant byte address 0x4 - core index']
  #allocation1 [shape = 'u32[72,128]{1,0:T(1,128)}', space=vmem, size = 0x9000, scoped, tag = 'internal scratch']
  %s0 = inlined_call_operand.vmem [shape: f32[112,16], index: 0, kind: input, shape index: {}]
  %s1 = inlined_call_operand.vmem [shape: f32[16,133], index: 1, kind: input, shape index: {}]
  %s2 = inlined_call_operand.vmem [shape: f32[1,133], index: 2, kind: input, shape index: {}]
  %s3 = inlined_call_operand.vmem [shape: f32[128,64], index: 3, kind: input, shape index: {}]
  %s4 = inlined_call_operand.vmem [shape: f32[1,64], index: 4, kind: input, shape index: {}]
  %s5 = inlined_call_operand.vmem [shape: f32[64,32], index: 5, kind: input, shape index: {}]
  %s6 = inlined_call_operand.vmem [shape: f32[1,32], index: 6, kind: input, shape index: {}]
  %s7 = inlined_call_operand.vmem [shape: f32[32,5], index: 7, kind: input, shape index: {}]
  %s8 = inlined_call_operand.vmem [shape: f32[1,5], index: 8, kind: input, shape index: {}]
  %s9 = inlined_call_operand.vmem [shape: f32[112,5], index: 9, kind: output, shape index: {}]
  %s10 = sld [smem:[#allocation0]]
  $region69: #{tpu_custom_call.1} parent=0
    _
  %s12 = ssub.s32 1, %s10
  %s13 = scalar_select 0, %s12, %s10
  loop: start=0, step=1, limit=4
  $region2: #{tpu_custom_call.1} parent=0 // loop_pre_header
    _
  $region3: #{tpu_custom_call.1} parent=0 // loop_header
    %s15 = sphi 0, %s19
    %p16 = scmp.ge.s32.totalorder %s15, 4
    %s25 = sphi 0, %s27
    %s28 = sphi 0, %s25
    %s29 = sphi 0, %s28
    %s45 = sphi 0, %s29
    %s49 = sphi 0, %s49
    %s51 = sphi 0, %s49
    %s52 = sphi 0, %s51
    %s66 = sphi 0, %s52
    %s70 = sphi 0, %s70
    %s72 = sphi 0, %s70
    %s73 = sphi 0, %s72
    %s87 = sphi 0, %s73
    %s91 = sphi 0, %s91
    %s93 = sphi 0, %s91
    %s94 = sphi 0, %s93
    %s108 = sphi 0, %s94
    %s112 = sphi 0, %s112
    %s114 = sphi 0, %s112
    %s115 = sphi 0, %s114
    %s129 = sphi 0, %s115
    %s133 = sphi 0, %s133
    %s135 = sphi 0, %s133
    %s136 = sphi 0, %s135
    %s150 = sphi 0, %s136
    %s154 = sphi 0, %s154
    %s156 = sphi 0, %s154
    %s157 = sphi 0, %s156
    %s171 = sphi 0, %s157
    %s175 = sphi 0, %s175
    %s177 = sphi 0, %s175
    %s178 = sphi 0, %s177
    %s192 = sphi 0, %s178
    %s196 = sphi 0, %s196
    %s198 = sphi 0, %s196
    %s199 = sphi 0, %s198
    %s213 = sphi 0, %s199
    %s219 = sphi 0, %s221
    %s222 = sphi 0, %s219
    %s223 = sphi 0, %s222
    %s239 = sphi 0, %s223
  $region4: #{tpu_custom_call.1} parent=0 // loop_header_branch
    %18 = sbr.rel (%p16) target = $region8
  $region5: #{tpu_custom_call.1} parent=0 // loop_body
    %s20 = ssub.s32 %s15, 1
    %s21 = ssub.s32 %s15, 2
    %s22 = sadd.s32 %s15, 1
    %s23 = ssub.s32 %s15, %s22
    %p24 = scmp.eq.s32.totalorder %s23, 0
    %s26 = sadd.s32 %s25, 1
    %s27 = scalar_select %p24, %s25, %s26
    %p30 = pneg %p24
    %p31 = scmp.eq.s32.totalorder %s15, 1
    %p32 = por %p30, %p31
    %p33 = scmp.ne.s32.totalorder %s25, %s28
    %p34 = scmp.eq.s32.totalorder %s15, 0
    %p35 = por %p33, %p34
    %p36 = scmp.ne.s32.totalorder %s25, %s28
    %p37 = scmp.eq.s32.totalorder %s20, 1
    %p38 = por %p36, %p37
    %p39 = scmp.ne.s32.totalorder %s28, %s29
    %p40 = scmp.eq.s32.totalorder %s20, 0
    %p41 = por %p39, %p40
    %p42 = scmp.ne.s32.totalorder %s28, %s29
    %p43 = scmp.eq.s32.totalorder %s21, 1
    %p44 = por %p42, %p43
    %p46 = scmp.ne.s32.totalorder %s29, %s45
    %p47 = scmp.eq.s32.totalorder %s21, 0
    %p48 = por %p46, %p47
    %s50 = sadd.s32 %s49, 1
    %p53 = scmp.eq.s32.totalorder %s15, 1
    %p54 = scmp.ne.s32.totalorder %s49, %s51
    %p55 = scmp.eq.s32.totalorder %s15, 0
    %p56 = por %p54, %p55
    %p57 = scmp.ne.s32.totalorder %s49, %s51
    %p58 = scmp.eq.s32.totalorder %s20, 1
    %p59 = por %p57, %p58
    %p60 = scmp.ne.s32.totalorder %s51, %s52
    %p61 = scmp.eq.s32.totalorder %s20, 0
    %p62 = por %p60, %p61
    %p63 = scmp.ne.s32.totalorder %s51, %s52
    %p64 = scmp.eq.s32.totalorder %s21, 1
    %p65 = por %p63, %p64
    %p67 = scmp.ne.s32.totalorder %s52, %s66
    %p68 = scmp.eq.s32.totalorder %s21, 0
    %p69 = por %p67, %p68
    %s71 = sadd.s32 %s70, 1
    %p74 = scmp.eq.s32.totalorder %s15, 1
    %p75 = scmp.ne.s32.totalorder %s70, %s72
    %p76 = scmp.eq.s32.totalorder %s15, 0
    %p77 = por %p75, %p76
    %p78 = scmp.ne.s32.totalorder %s70, %s72
    %p79 = scmp.eq.s32.totalorder %s20, 1
    %p80 = por %p78, %p79
    %p81 = scmp.ne.s32.totalorder %s72, %s73
    %p82 = scmp.eq.s32.totalorder %s20, 0
    %p83 = por %p81, %p82
    %p84 = scmp.ne.s32.totalorder %s72, %s73
    %p85 = scmp.eq.s32.totalorder %s21, 1
    %p86 = por %p84, %p85
    %p88 = scmp.ne.s32.totalorder %s73, %s87
    %p89 = scmp.eq.s32.totalorder %s21, 0
    %p90 = por %p88, %p89
    %s92 = sadd.s32 %s91, 1
    %p95 = scmp.eq.s32.totalorder %s15, 1
    %p96 = scmp.ne.s32.totalorder %s91, %s93
    %p97 = scmp.eq.s32.totalorder %s15, 0
    %p98 = por %p96, %p97
    %p99 = scmp.ne.s32.totalorder %s91, %s93
    %p100 = scmp.eq.s32.totalorder %s20, 1
    %p101 = por %p99, %p100
    %p102 = scmp.ne.s32.totalorder %s93, %s94
    %p103 = scmp.eq.s32.totalorder %s20, 0
    %p104 = por %p102, %p103
    %p105 = scmp.ne.s32.totalorder %s93, %s94
    %p106 = scmp.eq.s32.totalorder %s21, 1
    %p107 = por %p105, %p106
    %p109 = scmp.ne.s32.totalorder %s94, %s108
    %p110 = scmp.eq.s32.totalorder %s21, 0
    %p111 = por %p109, %p110
    %s113 = sadd.s32 %s112, 1
    %p116 = scmp.eq.s32.totalorder %s15, 1
    %p117 = scmp.ne.s32.totalorder %s112, %s114
    %p118 = scmp.eq.s32.totalorder %s15, 0
    %p119 = por %p117, %p118
    %p120 = scmp.ne.s32.totalorder %s112, %s114
    %p121 = scmp.eq.s32.totalorder %s20, 1
    %p122 = por %p120, %p121
    %p123 = scmp.ne.s32.totalorder %s114, %s115
    %p124 = scmp.eq.s32.totalorder %s20, 0
    %p125 = por %p123, %p124
    %p126 = scmp.ne.s32.totalorder %s114, %s115
    %p127 = scmp.eq.s32.totalorder %s21, 1
    %p128 = por %p126, %p127
    %p130 = scmp.ne.s32.totalorder %s115, %s129
    %p131 = scmp.eq.s32.totalorder %s21, 0
    %p132 = por %p130, %p131
    %s134 = sadd.s32 %s133, 1
    %p137 = scmp.eq.s32.totalorder %s15, 1
    %p138 = scmp.ne.s32.totalorder %s133, %s135
    %p139 = scmp.eq.s32.totalorder %s15, 0
    %p140 = por %p138, %p139
    %p141 = scmp.ne.s32.totalorder %s133, %s135
    %p142 = scmp.eq.s32.totalorder %s20, 1
    %p143 = por %p141, %p142
    %p144 = scmp.ne.s32.totalorder %s135, %s136
    %p145 = scmp.eq.s32.totalorder %s20, 0
    %p146 = por %p144, %p145
    %p147 = scmp.ne.s32.totalorder %s135, %s136
    %p148 = scmp.eq.s32.totalorder %s21, 1
    %p149 = por %p147, %p148
    %p151 = scmp.ne.s32.totalorder %s136, %s150
    %p152 = scmp.eq.s32.totalorder %s21, 0
    %p153 = por %p151, %p152
    %s155 = sadd.s32 %s154, 1
    %p158 = scmp.eq.s32.totalorder %s15, 1
    %p159 = scmp.ne.s32.totalorder %s154, %s156
    %p160 = scmp.eq.s32.totalorder %s15, 0
    %p161 = por %p159, %p160
    %p162 = scmp.ne.s32.totalorder %s154, %s156
    %p163 = scmp.eq.s32.totalorder %s20, 1
    %p164 = por %p162, %p163
    %p165 = scmp.ne.s32.totalorder %s156, %s157
    %p166 = scmp.eq.s32.totalorder %s20, 0
    %p167 = por %p165, %p166
    %p168 = scmp.ne.s32.totalorder %s156, %s157
    %p169 = scmp.eq.s32.totalorder %s21, 1
    %p170 = por %p168, %p169
    %p172 = scmp.ne.s32.totalorder %s157, %s171
    %p173 = scmp.eq.s32.totalorder %s21, 0
    %p174 = por %p172, %p173
    %s176 = sadd.s32 %s175, 1
    %p179 = scmp.eq.s32.totalorder %s15, 1
    %p180 = scmp.ne.s32.totalorder %s175, %s177
    %p181 = scmp.eq.s32.totalorder %s15, 0
    %p182 = por %p180, %p181
    %p183 = scmp.ne.s32.totalorder %s175, %s177
    %p184 = scmp.eq.s32.totalorder %s20, 1
    %p185 = por %p183, %p184
    %p186 = scmp.ne.s32.totalorder %s177, %s178
    %p187 = scmp.eq.s32.totalorder %s20, 0
    %p188 = por %p186, %p187
    %p189 = scmp.ne.s32.totalorder %s177, %s178
    %p190 = scmp.eq.s32.totalorder %s21, 1
    %p191 = por %p189, %p190
    %p193 = scmp.ne.s32.totalorder %s178, %s192
    %p194 = scmp.eq.s32.totalorder %s21, 0
    %p195 = por %p193, %p194
    %s197 = sadd.s32 %s196, 1
    %p200 = scmp.eq.s32.totalorder %s15, 1
    %p201 = scmp.ne.s32.totalorder %s196, %s198
    %p202 = scmp.eq.s32.totalorder %s15, 0
    %p203 = por %p201, %p202
    %p204 = scmp.ne.s32.totalorder %s196, %s198
    %p205 = scmp.eq.s32.totalorder %s20, 1
    %p206 = por %p204, %p205
    %p207 = scmp.ne.s32.totalorder %s198, %s199
    %p208 = scmp.eq.s32.totalorder %s20, 0
    %p209 = por %p207, %p208
    %p210 = scmp.ne.s32.totalorder %s198, %s199
    %p211 = scmp.eq.s32.totalorder %s21, 1
    %p212 = por %p210, %p211
    %p214 = scmp.ne.s32.totalorder %s199, %s213
    %p215 = scmp.eq.s32.totalorder %s21, 0
    %p216 = por %p214, %p215
    %s217 = ssub.s32 %s15, %s22
    %p218 = scmp.eq.s32.totalorder %s217, 0
    %s220 = sadd.s32 %s219, 1
    %s221 = scalar_select %p218, %s219, %s220
    %p224 = pneg %p218
    %p225 = scmp.eq.s32.totalorder %s15, 1
    %p226 = por %p224, %p225
    %p227 = scmp.ne.s32.totalorder %s219, %s222
    %p228 = scmp.eq.s32.totalorder %s15, 0
    %p229 = por %p227, %p228
    %p230 = scmp.ne.s32.totalorder %s219, %s222
    %p231 = scmp.eq.s32.totalorder %s20, 1
    %p232 = por %p230, %p231
    %p233 = scmp.ne.s32.totalorder %s222, %s223
    %p234 = scmp.eq.s32.totalorder %s20, 0
    %p235 = por %p233, %p234
    %p236 = scmp.ne.s32.totalorder %s222, %s223
    %p237 = scmp.eq.s32.totalorder %s21, 1
    %p238 = por %p236, %p237
    %p240 = scmp.ne.s32.totalorder %s223, %s239
    %p241 = scmp.eq.s32.totalorder %s21, 0
    %p242 = por %p240, %p241
    %p243 = scmp.le.s32.totalorder 1, %s15
    %p244 = scmp.lt.s32.totalorder %s15, 3
    %p245 = pnand %p243, %p244
    %p246 = pneg %p245
    // Predicated region
    $region9: #{tpu_custom_call.1} parent=5 // pred_check
      _
    $region10: #{tpu_custom_call.1} parent=5 // pred_check_branch
      %248 = sbr.rel (%p245) target = $region12
    $region11: #{tpu_custom_call.1} parent=5 // pred_region
      %s249 = ssub.s32 %s15, 1
      // Predicated region
      $region13: #{tpu_custom_call.1} parent=11 // pred_check
        %p250 = pneg %p62
      $region14: #{tpu_custom_call.1} parent=11 // pred_check_branch
        %252 = sbr.rel (%p250) target = $region16
      $region15: #{tpu_custom_call.1} parent=11 // pred_region
        _
      $region16: #{tpu_custom_call.1} parent=11 // pred_fallthru
        _
      // Predicated region
      $region17: #{tpu_custom_call.1} parent=11 // pred_check
        %p253 = pneg %p83
      $region18: #{tpu_custom_call.1} parent=11 // pred_check_branch
        %255 = sbr.rel (%p253) target = $region20
      $region19: #{tpu_custom_call.1} parent=11 // pred_region
        _
      $region20: #{tpu_custom_call.1} parent=11 // pred_fallthru
        _
      // Predicated region
      $region21: #{tpu_custom_call.1} parent=11 // pred_check
        %p256 = pneg %p104
      $region22: #{tpu_custom_call.1} parent=11 // pred_check_branch
        %258 = sbr.rel (%p256) target = $region24
      $region23: #{tpu_custom_call.1} parent=11 // pred_region
        _
      $region24: #{tpu_custom_call.1} parent=11 // pred_fallthru
        _
      // Predicated region
      $region25: #{tpu_custom_call.1} parent=11 // pred_check
        %p259 = pneg %p125
      $region26: #{tpu_custom_call.1} parent=11 // pred_check_branch
        %261 = sbr.rel (%p259) target = $region28
      $region27: #{tpu_custom_call.1} parent=11 // pred_region
        _
      $region28: #{tpu_custom_call.1} parent=11 // pred_fallthru
        _
      // Predicated region
      $region29: #{tpu_custom_call.1} parent=11 // pred_check
        %p262 = pneg %p146
      $region30: #{tpu_custom_call.1} parent=11 // pred_check_branch
        %264 = sbr.rel (%p262) target = $region32
      $region31: #{tpu_custom_call.1} parent=11 // pred_region
        _
      $region32: #{tpu_custom_call.1} parent=11 // pred_fallthru
        _
      // Predicated region
      $region33: #{tpu_custom_call.1} parent=11 // pred_check
        %p265 = pneg %p167
      $region34: #{tpu_custom_call.1} parent=11 // pred_check_branch
        %267 = sbr.rel (%p265) target = $region36
      $region35: #{tpu_custom_call.1} parent=11 // pred_region
        _
      $region36: #{tpu_custom_call.1} parent=11 // pred_fallthru
        _
      // Predicated region
      $region37: #{tpu_custom_call.1} parent=11 // pred_check
        %p268 = pneg %p188
      $region38: #{tpu_custom_call.1} parent=11 // pred_check_branch
        %270 = sbr.rel (%p268) target = $region40
      $region39: #{tpu_custom_call.1} parent=11 // pred_region
        _
      $region40: #{tpu_custom_call.1} parent=11 // pred_fallthru
        _
      // Predicated region
      $region41: #{tpu_custom_call.1} parent=11 // pred_check
        %p271 = pneg %p209
      $region42: #{tpu_custom_call.1} parent=11 // pred_check_branch
        %273 = sbr.rel (%p271) target = $region44
      $region43: #{tpu_custom_call.1} parent=11 // pred_region
        _
      $region44: #{tpu_custom_call.1} parent=11 // pred_fallthru
        _
    $region12: #{tpu_custom_call.1} parent=5 // pred_fallthru
      _
    %p274 = scmp.lt.s32.totalorder %s15, 2
    // Predicated region
    $region45: #{tpu_custom_call.1} parent=5 // pred_check
      %p275 = pneg %p274
    $region46: #{tpu_custom_call.1} parent=5 // pred_check_branch
      %277 = sbr.rel (%p275) target = $region48
    $region47: #{tpu_custom_call.1} parent=5 // pred_region
      // Predicated region
      $region49: #{tpu_custom_call.1} parent=47 // pred_check
        %p278 = pneg %p35
      $region50: #{tpu_custom_call.1} parent=47 // pred_check_branch
        %280 = sbr.rel (%p278) target = $region52
      $region51: #{tpu_custom_call.1} parent=47 // pred_region
        %s281 = smul.u32 7, %s15
        %p282 = scmp.lt.s32.totalorder %s281, 13
        %s283 = scalar_select %p282, %s281, 13
        %s284 = smul.addr %s283, 8
        %s285 = scalar_lea.vmem %s0, %s284
        %s286 = smul.u32 7, %s15
      $region52: #{tpu_custom_call.1} parent=47 // pred_fallthru
        _
    $region48: #{tpu_custom_call.1} parent=5 // pred_fallthru
      _
    %p287 = scmp.le.s32.totalorder 1, %s15
    %p288 = scmp.lt.s32.totalorder %s15, 3
    %p289 = pnand %p287, %p288
    %p290 = pneg %p289
    // Predicated region
    $region53: #{tpu_custom_call.1} parent=5 // pred_check
      _
    $region54: #{tpu_custom_call.1} parent=5 // pred_check_branch
      %292 = sbr.rel (%p289) target = $region56
    $region55: #{tpu_custom_call.1} parent=5 // pred_region
      %s293 = ssub.s32 %s15, 1
      %s294 = smul.u32 7, %s20
      %p295 = scmp.lt.s32.totalorder %s294, 13
      %s296 = scalar_select %p295, %s294, 13
      %s297 = smul.addr %s296, 8
      %s298 = scalar_lea.vmem %s0, %s297
      %p299 = pneg %p41
      %p300 = pneg %p38
      %p301 = pneg %p62
      %p302 = pneg %p59
      %p303 = pneg %p83
      %p304 = pneg %p80
      %p305 = pneg %p104
      %p306 = pneg %p101
      %p307 = pneg %p125
      %p308 = pneg %p122
      %p309 = pneg %p146
      %p310 = pneg %p143
      %p311 = pneg %p167
      %p312 = pneg %p164
      %p313 = pneg %p188
      %p314 = pneg %p185
      %p315 = pneg %p209
      %p316 = pneg %p206
      %p317 = pneg %p235
      %p318 = pneg %p232
      %s319 = smul.u32 7, %s20
      %p320 = scmp.lt.s32.totalorder %s319, 13
      %s321 = scalar_select %p320, %s319, 13
      %s322 = smul.addr %s321, 8
      %s323 = scalar_lea.vmem %s9, %s322
      %s324 = smul.u32 7, %s20
      %p325 = scmp.lt.s32.totalorder %s324, 13
      %s326 = scalar_select %p325, %s324, 13
      %s327 = smul.addr %s326, 8
      %s328 = scalar_lea.vmem %s0, %s327
      %s329 = smul.u32 7, %s20
      %s330 = smul.u32 7, %s20
      %p331 = scmp.lt.s32.totalorder %s330, 13
      %s332 = scalar_select %p331, %s330, 13
      %s333 = smul.addr %s332, 8
      %s334 = scalar_lea.vmem %s9, %s333
      %s335 = smul.u32 7, %s20
      %v336 = vld [vmem:[%s1] sm:$0xff]
      %v337 = vld [vmem:[%s1 + $0x8] sm:$0xff]
      %v338 = vld [vmem:[%s1 + $0x10] sm:$0xff]
      %v339 = vld [vmem:[%s1 + $0x18] sm:$0xff]
      %v340 = vld [vmem:[%s328] sm:$0xff]
      %v341 = vld [vmem:[%s328 + $0x8] sm:$0xff]
      %v342 = vld [vmem:[%s328 + $0x10] sm:$0xff]
      %v343 = vld [vmem:[%s328 + $0x18] sm:$0xff]
      %v344 = vld [vmem:[%s328 + $0x20] sm:$0xff]
      %v345 = vld [vmem:[%s328 + $0x28] sm:$0xff]
      %v346 = vld [vmem:[%s328 + $0x30] sm:$0xff]
      %v347 = vld [vmem:[%s2] sm:$0x3]
      %v349 = vperm.slane %v347, 0
      %v350 = vperm.slane %v347, 1
      %vm353 = vcmask 130048
      %v355 = vsel %vm353, %v340, 0
      %v358 = vsel %vm353, %v341, 0
      %v361 = vsel %vm353, %v342, 0
      %v364 = vsel %vm353, %v343, 0
      %v367 = vsel %vm353, %v344, 0
      %v370 = vsel %vm353, %v345, 0
      %v373 = vsel %vm353, %v346, 0
      %375 = vmatpush.msra.mxu0 0.0
      %376 = vmatpush.msra.mxu0 0.0
      %377 = vmatpush.msra.mxu0 0.0
      %378 = vmatpush.msra.mxu0 0.0
      %379 = vmatpush.msra.mxu0 0.0
      %380 = vmatpush.msra.mxu0 0.0
      %381 = vmatpush.msra.mxu0 0.0
      %382 = vmatpush.msra.mxu0 0.0
      %383 = vmatpush.msra.mxu0 0.0
      %384 = vmatpush.msra.mxu0 0.0
      %385 = vmatpush.msra.mxu0 0.0
      %386 = vmatpush.msra.mxu0 0.0
      %387 = vmatpush.msra.mxu0 0.0
      %388 = vmatpush.msra.mxu0 0.0
      %389 = vmatpush.msra.mxu0 %v338
      %390 = vmatpush.msra.mxu0 %v336
      %391 = vmatmul.f32.gmra.mxu0 %v355
      %v392 = vpop.f32.mrf.mxu0
      %v393 = vadd.f32 %v349, %v392
      %394 = vmatmul.f32.gmra.mxu0 %v358
      %v395 = vpop.f32.mrf.mxu0
      %v396 = vadd.f32 %v349, %v395
      %397 = vmatmul.f32.gmra.mxu0 %v361
      %v398 = vpop.f32.mrf.mxu0
      %v399 = vadd.f32 %v349, %v398
      %400 = vmatmul.f32.gmra.mxu0 %v364
      %v401 = vpop.f32.mrf.mxu0
      %v402 = vadd.f32 %v349, %v401
      %403 = vmatmul.f32.gmra.mxu0 %v367
      %v404 = vpop.f32.mrf.mxu0
      %v405 = vadd.f32 %v349, %v404
      %406 = vmatmul.f32.gmra.mxu0 %v370
      %v407 = vpop.f32.mrf.mxu0
      %v408 = vadd.f32 %v349, %v407
      %409 = vmatmul.f32.gmra.mxu0 %v373
      %v410 = vpop.f32.mrf.mxu0
      %v411 = vadd.f32 %v349, %v410
      %412 = vdwg.mxu0
      %413 = vmatpush.msra.mxu0 0.0
      %414 = vmatpush.msra.mxu0 0.0
      %415 = vmatpush.msra.mxu0 0.0
      %416 = vmatpush.msra.mxu0 0.0
      %417 = vmatpush.msra.mxu0 0.0
      %418 = vmatpush.msra.mxu0 0.0
      %419 = vmatpush.msra.mxu0 0.0
      %420 = vmatpush.msra.mxu0 0.0
      %421 = vmatpush.msra.mxu0 0.0
      %422 = vmatpush.msra.mxu0 0.0
      %423 = vmatpush.msra.mxu0 0.0
      %424 = vmatpush.msra.mxu0 0.0
      %425 = vmatpush.msra.mxu0 0.0
      %426 = vmatpush.msra.mxu0 0.0
      %427 = vmatpush.msra.mxu0 %v339
      %428 = vmatpush.msra.mxu0 %v337
      %429 = vmatmul.f32.gmra.mxu0 %v355
      %v430 = vpop.f32.mrf.mxu0
      %v431 = vadd.f32 %v350, %v430
      %432 = vmatmul.f32.gmra.mxu0 %v358
      %v433 = vpop.f32.mrf.mxu0
      %v434 = vadd.f32 %v350, %v433
      %435 = vmatmul.f32.gmra.mxu0 %v361
      %v436 = vpop.f32.mrf.mxu0
      %v437 = vadd.f32 %v350, %v436
      %438 = vmatmul.f32.gmra.mxu0 %v364
      %v439 = vpop.f32.mrf.mxu0
      %v440 = vadd.f32 %v350, %v439
      %441 = vmatmul.f32.gmra.mxu0 %v367
      %v442 = vpop.f32.mrf.mxu0
      %v443 = vadd.f32 %v350, %v442
      %444 = vmatmul.f32.gmra.mxu0 %v370
      %v445 = vpop.f32.mrf.mxu0
      %v446 = vadd.f32 %v350, %v445
      %447 = vmatmul.f32.gmra.mxu0 %v373
      %v448 = vpop.f32.mrf.mxu0
      %v449 = vadd.f32 %v350, %v448
      %450 = vdwg.mxu0
      %v451 = vxor.u32 %v393, 2147483648
      %v452 = vxor.u32 %v396, 2147483648
      %v453 = vxor.u32 %v399, 2147483648
      %v454 = vxor.u32 %v402, 2147483648
      %v455 = vxor.u32 %v405, 2147483648
      %v456 = vxor.u32 %v408, 2147483648
      %v457 = vxor.u32 %v411, 2147483648
      %v458 = vmul.f32 %v451, 1.442695
      %v459 = vpow.pop %v458
      %v460 = vmul.f32 %v452, 1.442695
      %v461 = vpow.pop %v460
      %v462 = vmul.f32 %v453, 1.442695
      %v463 = vpow.pop %v462
      %v464 = vmul.f32 %v454, 1.442695
      %v465 = vpow.pop %v464
      %v466 = vmul.f32 %v455, 1.442695
      %v467 = vpow.pop %v466
      %v468 = vmul.f32 %v456, 1.442695
      %v469 = vpow.pop %v468
      %v470 = vmul.f32 %v457, 1.442695
      %v471 = vpow.pop %v470
      %v472 = vadd.f32 %v459, 1.0
      %v473 = vadd.f32 %v461, 1.0
      %v474 = vadd.f32 %v463, 1.0
      %v475 = vadd.f32 %v465, 1.0
      %v476 = vadd.f32 %v467, 1.0
      %v477 = vadd.f32 %v469, 1.0
      %v478 = vadd.f32 %v471, 1.0
      %v479 = vrcp.pop %v472
      %v480 = vmul.f32 %v472, %v479
      %v481 = vsub.f32 1.0, %v480
      %v482 = vmul.f32 %v479, %v481
      %v483 = vadd.f32 %v479, %v482
      %vm484 = vweird.f32 %v472
      %vm485 = vweird.f32 %v479
      %vm486 = vmor %vm484, %vm485
      %v487 = vsel %vm486, %v479, %v483
      %v488 = vand.u32 2147483647, %v472
      %vm489 = vcmp.eq.f32.partialorder %v488, 8.507059e+37
      %v490 = vand.u32 %v472, 2147483648
      %v491 = vor.u32 1.1754944e-38, %v490
      %v492 = vsel %vm489, %v491, %v487
      %v493 = vmul.f32 1.0, %v492
      %v494 = vrcp.pop %v473
      %v495 = vmul.f32 %v473, %v494
      %v496 = vsub.f32 1.0, %v495
      %v497 = vmul.f32 %v494, %v496
      %v498 = vadd.f32 %v494, %v497
      %vm499 = vweird.f32 %v473
      %vm500 = vweird.f32 %v494
      %vm501 = vmor %vm499, %vm500
      %v502 = vsel %vm501, %v494, %v498
      %v503 = vand.u32 2147483647, %v473
      %vm504 = vcmp.eq.f32.partialorder %v503, 8.507059e+37
      %v505 = vand.u32 %v473, 2147483648
      %v506 = vor.u32 1.1754944e-38, %v505
      %v507 = vsel %vm504, %v506, %v502
      %v508 = vmul.f32 1.0, %v507
      %v509 = vrcp.pop %v474
      %v510 = vmul.f32 %v474, %v509
      %v511 = vsub.f32 1.0, %v510
      %v512 = vmul.f32 %v509, %v511
      %v513 = vadd.f32 %v509, %v512
      %vm514 = vweird.f32 %v474
      %vm515 = vweird.f32 %v509
      %vm516 = vmor %vm514, %vm515
      %v517 = vsel %vm516, %v509, %v513
      %v518 = vand.u32 2147483647, %v474
      %vm519 = vcmp.eq.f32.partialorder %v518, 8.507059e+37
      %v520 = vand.u32 %v474, 2147483648
      %v521 = vor.u32 1.1754944e-38, %v520
      %v522 = vsel %vm519, %v521, %v517
      %v523 = vmul.f32 1.0, %v522
      %v524 = vrcp.pop %v475
      %v525 = vmul.f32 %v475, %v524
      %v526 = vsub.f32 1.0, %v525
      %v527 = vmul.f32 %v524, %v526
      %v528 = vadd.f32 %v524, %v527
      %vm529 = vweird.f32 %v475
      %vm530 = vweird.f32 %v524
      %vm531 = vmor %vm529, %vm530
      %v532 = vsel %vm531, %v524, %v528
      %v533 = vand.u32 2147483647, %v475
      %vm534 = vcmp.eq.f32.partialorder %v533, 8.507059e+37
      %v535 = vand.u32 %v475, 2147483648
      %v536 = vor.u32 1.1754944e-38, %v535
      %v537 = vsel %vm534, %v536, %v532
      %v538 = vmul.f32 1.0, %v537
      %v539 = vrcp.pop %v476
      %v540 = vmul.f32 %v476, %v539
      %v541 = vsub.f32 1.0, %v540
      %v542 = vmul.f32 %v539, %v541
      %v543 = vadd.f32 %v539, %v542
      %vm544 = vweird.f32 %v476
      %vm545 = vweird.f32 %v539
      %vm546 = vmor %vm544, %vm545
      %v547 = vsel %vm546, %v539, %v543
      %v548 = vand.u32 2147483647, %v476
      %vm549 = vcmp.eq.f32.partialorder %v548, 8.507059e+37
      %v550 = vand.u32 %v476, 2147483648
      %v551 = vor.u32 1.1754944e-38, %v550
      %v552 = vsel %vm549, %v551, %v547
      %v553 = vmul.f32 1.0, %v552
      %v554 = vrcp.pop %v477
      %v555 = vmul.f32 %v477, %v554
      %v556 = vsub.f32 1.0, %v555
      %v557 = vmul.f32 %v554, %v556
      %v558 = vadd.f32 %v554, %v557
      %vm559 = vweird.f32 %v477
      %vm560 = vweird.f32 %v554
      %vm561 = vmor %vm559, %vm560
      %v562 = vsel %vm561, %v554, %v558
      %v563 = vand.u32 2147483647, %v477
      %vm564 = vcmp.eq.f32.partialorder %v563, 8.507059e+37
      %v565 = vand.u32 %v477, 2147483648
      %v566 = vor.u32 1.1754944e-38, %v565
      %v567 = vsel %vm564, %v566, %v562
      %v568 = vmul.f32 1.0, %v567
      %v569 = vrcp.pop %v478
      %v570 = vmul.f32 %v478, %v569
      %v571 = vsub.f32 1.0, %v570
      %v572 = vmul.f32 %v569, %v571
      %v573 = vadd.f32 %v569, %v572
      %vm574 = vweird.f32 %v478
      %vm575 = vweird.f32 %v569
      %vm576 = vmor %vm574, %vm575
      %v577 = vsel %vm576, %v569, %v573
      %v578 = vand.u32 2147483647, %v478
      %vm579 = vcmp.eq.f32.partialorder %v578, 8.507059e+37
      %v580 = vand.u32 %v478, 2147483648
      %v581 = vor.u32 1.1754944e-38, %v580
      %v582 = vsel %vm579, %v581, %v577
      %v583 = vmul.f32 1.0, %v582
      %v584 = vmul.f32 %v393, %v493
      %v585 = vmul.f32 %v396, %v508
      %v586 = vmul.f32 %v399, %v523
      %v587 = vmul.f32 %v402, %v538
      %v588 = vmul.f32 %v405, %v553
      %v589 = vmul.f32 %v408, %v568
      %v590 = vmul.f32 %v411, %v583
      %v591 = vld [vmem:[%s3] sm:$0xff]
      %v592 = vld [vmem:[%s3 + $0x8] sm:$0xff]
      %v593 = vld [vmem:[%s3 + $0x10] sm:$0xff]
      %v594 = vld [vmem:[%s3 + $0x18] sm:$0xff]
      %v595 = vld [vmem:[%s3 + $0x20] sm:$0xff]
      %v596 = vld [vmem:[%s3 + $0x28] sm:$0xff]
      %v597 = vld [vmem:[%s3 + $0x30] sm:$0xff]
      %v598 = vld [vmem:[%s3 + $0x38] sm:$0xff]
      %v599 = vld [vmem:[%s3 + $0x40] sm:$0xff]
      %v600 = vld [vmem:[%s3 + $0x48] sm:$0xff]
      %v601 = vld [vmem:[%s3 + $0x50] sm:$0xff]
      %v602 = vld [vmem:[%s3 + $0x58] sm:$0xff]
      %v603 = vld [vmem:[%s3 + $0x60] sm:$0xff]
      %v604 = vld [vmem:[%s3 + $0x68] sm:$0xff]
      %v605 = vld [vmem:[%s3 + $0x70] sm:$0xff]
      %v606 = vld [vmem:[%s3 + $0x78] sm:$0xff]
      %v607 = vld [vmem:[%s4] sm:$0x1]
      %v609 = vperm.slane %v607, 0
      %611 = vmatpush.msra.mxu0 %v606
      %612 = vmatpush.msra.mxu0 %v605
      %613 = vmatpush.msra.mxu0 %v604
      %614 = vmatpush.msra.mxu0 %v603
      %615 = vmatpush.msra.mxu0 %v602
      %616 = vmatpush.msra.mxu0 %v601
      %617 = vmatpush.msra.mxu0 %v600
      %618 = vmatpush.msra.mxu0 %v599
      %619 = vmatpush.msra.mxu0 %v598
      %620 = vmatpush.msra.mxu0 %v597
      %621 = vmatpush.msra.mxu0 %v596
      %622 = vmatpush.msra.mxu0 %v595
      %623 = vmatpush.msra.mxu0 %v594
      %624 = vmatpush.msra.mxu0 %v593
      %625 = vmatpush.msra.mxu0 %v592
      %626 = vmatpush.msra.mxu0 %v591
      %627 = vmatmul.f32.gmra.mxu0 %v584
      %v628 = vpop.f32.mrf.mxu0
      %v629 = vadd.f32 %v609, %v628
      %630 = vmatmul.f32.gmra.mxu0 %v585
      %v631 = vpop.f32.mrf.mxu0
      %v632 = vadd.f32 %v609, %v631
      %633 = vmatmul.f32.gmra.mxu0 %v586
      %v634 = vpop.f32.mrf.mxu0
      %v635 = vadd.f32 %v609, %v634
      %636 = vmatmul.f32.gmra.mxu0 %v587
      %v637 = vpop.f32.mrf.mxu0
      %v638 = vadd.f32 %v609, %v637
      %639 = vmatmul.f32.gmra.mxu0 %v588
      %v640 = vpop.f32.mrf.mxu0
      %v641 = vadd.f32 %v609, %v640
      %642 = vmatmul.f32.gmra.mxu0 %v589
      %v643 = vpop.f32.mrf.mxu0
      %v644 = vadd.f32 %v609, %v643
      %645 = vmatmul.f32.gmra.mxu0 %v590
      %v646 = vpop.f32.mrf.mxu0
      %v647 = vadd.f32 %v609, %v646
      %648 = vdwg.mxu0
      %v649 = vxor.u32 %v629, 2147483648
      %v650 = vxor.u32 %v632, 2147483648
      %v651 = vxor.u32 %v635, 2147483648
      %v652 = vxor.u32 %v638, 2147483648
      %v653 = vxor.u32 %v641, 2147483648
      %v654 = vxor.u32 %v644, 2147483648
      %v655 = vxor.u32 %v647, 2147483648
      %v656 = vmul.f32 %v649, 1.442695
      %v657 = vpow.pop %v656
      %v658 = vmul.f32 %v650, 1.442695
      %v659 = vpow.pop %v658
      %v660 = vmul.f32 %v651, 1.442695
      %v661 = vpow.pop %v660
      %v662 = vmul.f32 %v652, 1.442695
      %v663 = vpow.pop %v662
      %v664 = vmul.f32 %v653, 1.442695
      %v665 = vpow.pop %v664
      %v666 = vmul.f32 %v654, 1.442695
      %v667 = vpow.pop %v666
      %v668 = vmul.f32 %v655, 1.442695
      %v669 = vpow.pop %v668
      %v670 = vadd.f32 %v657, 1.0
      %v671 = vadd.f32 %v659, 1.0
      %v672 = vadd.f32 %v661, 1.0
      %v673 = vadd.f32 %v663, 1.0
      %v674 = vadd.f32 %v665, 1.0
      %v675 = vadd.f32 %v667, 1.0
      %v676 = vadd.f32 %v669, 1.0
      %v677 = vrcp.pop %v670
      %v678 = vmul.f32 %v670, %v677
      %v679 = vsub.f32 1.0, %v678
      %v680 = vmul.f32 %v677, %v679
      %v681 = vadd.f32 %v677, %v680
      %vm682 = vweird.f32 %v670
      %vm683 = vweird.f32 %v677
      %vm684 = vmor %vm682, %vm683
      %v685 = vsel %vm684, %v677, %v681
      %v686 = vand.u32 2147483647, %v670
      %vm687 = vcmp.eq.f32.partialorder %v686, 8.507059e+37
      %v688 = vand.u32 %v670, 2147483648
      %v689 = vor.u32 1.1754944e-38, %v688
      %v690 = vsel %vm687, %v689, %v685
      %v691 = vmul.f32 1.0, %v690
      %v692 = vrcp.pop %v671
      %v693 = vmul.f32 %v671, %v692
      %v694 = vsub.f32 1.0, %v693
      %v695 = vmul.f32 %v692, %v694
      %v696 = vadd.f32 %v692, %v695
      %vm697 = vweird.f32 %v671
      %vm698 = vweird.f32 %v692
      %vm699 = vmor %vm697, %vm698
      %v700 = vsel %vm699, %v692, %v696
      %v701 = vand.u32 2147483647, %v671
      %vm702 = vcmp.eq.f32.partialorder %v701, 8.507059e+37
      %v703 = vand.u32 %v671, 2147483648
      %v704 = vor.u32 1.1754944e-38, %v703
      %v705 = vsel %vm702, %v704, %v700
      %v706 = vmul.f32 1.0, %v705
      %v707 = vrcp.pop %v672
      %v708 = vmul.f32 %v672, %v707
      %v709 = vsub.f32 1.0, %v708
      %v710 = vmul.f32 %v707, %v709
      %v711 = vadd.f32 %v707, %v710
      %vm712 = vweird.f32 %v672
      %vm713 = vweird.f32 %v707
      %vm714 = vmor %vm712, %vm713
      %v715 = vsel %vm714, %v707, %v711
      %v716 = vand.u32 2147483647, %v672
      %vm717 = vcmp.eq.f32.partialorder %v716, 8.507059e+37
      %v718 = vand.u32 %v672, 2147483648
      %v719 = vor.u32 1.1754944e-38, %v718
      %v720 = vsel %vm717, %v719, %v715
      %v721 = vmul.f32 1.0, %v720
      %v722 = vrcp.pop %v673
      %v723 = vmul.f32 %v673, %v722
      %v724 = vsub.f32 1.0, %v723
      %v725 = vmul.f32 %v722, %v724
      %v726 = vadd.f32 %v722, %v725
      %vm727 = vweird.f32 %v673
      %vm728 = vweird.f32 %v722
      %vm729 = vmor %vm727, %vm728
      %v730 = vsel %vm729, %v722, %v726
      %v731 = vand.u32 2147483647, %v673
      %vm732 = vcmp.eq.f32.partialorder %v731, 8.507059e+37
      %v733 = vand.u32 %v673, 2147483648
      %v734 = vor.u32 1.1754944e-38, %v733
      %v735 = vsel %vm732, %v734, %v730
      %v736 = vmul.f32 1.0, %v735
      %v737 = vrcp.pop %v674
      %v738 = vmul.f32 %v674, %v737
      %v739 = vsub.f32 1.0, %v738
      %v740 = vmul.f32 %v737, %v739
      %v741 = vadd.f32 %v737, %v740
      %vm742 = vweird.f32 %v674
      %vm743 = vweird.f32 %v737
      %vm744 = vmor %vm742, %vm743
      %v745 = vsel %vm744, %v737, %v741
      %v746 = vand.u32 2147483647, %v674
      %vm747 = vcmp.eq.f32.partialorder %v746, 8.507059e+37
      %v748 = vand.u32 %v674, 2147483648
      %v749 = vor.u32 1.1754944e-38, %v748
      %v750 = vsel %vm747, %v749, %v745
      %v751 = vmul.f32 1.0, %v750
      %v752 = vrcp.pop %v675
      %v753 = vmul.f32 %v675, %v752
      %v754 = vsub.f32 1.0, %v753
      %v755 = vmul.f32 %v752, %v754
      %v756 = vadd.f32 %v752, %v755
      %vm757 = vweird.f32 %v675
      %vm758 = vweird.f32 %v752
      %vm759 = vmor %vm757, %vm758
      %v760 = vsel %vm759, %v752, %v756
      %v761 = vand.u32 2147483647, %v675
      %vm762 = vcmp.eq.f32.partialorder %v761, 8.507059e+37
      %v763 = vand.u32 %v675, 2147483648
      %v764 = vor.u32 1.1754944e-38, %v763
      %v765 = vsel %vm762, %v764, %v760
      %v766 = vmul.f32 1.0, %v765
      %v767 = vrcp.pop %v676
      %v768 = vmul.f32 %v676, %v767
      %v769 = vsub.f32 1.0, %v768
      %v770 = vmul.f32 %v767, %v769
      %v771 = vadd.f32 %v767, %v770
      %vm772 = vweird.f32 %v676
      %vm773 = vweird.f32 %v767
      %vm774 = vmor %vm772, %vm773
      %v775 = vsel %vm774, %v767, %v771
      %v776 = vand.u32 2147483647, %v676
      %vm777 = vcmp.eq.f32.partialorder %v776, 8.507059e+37
      %v778 = vand.u32 %v676, 2147483648
      %v779 = vor.u32 1.1754944e-38, %v778
      %v780 = vsel %vm777, %v779, %v775
      %v781 = vmul.f32 1.0, %v780
      %v782 = vmul.f32 %v629, %v691
      %v783 = vmul.f32 %v632, %v706
      %v784 = vmul.f32 %v635, %v721
      %v785 = vmul.f32 %v638, %v736
      %v786 = vmul.f32 %v641, %v751
      %v787 = vmul.f32 %v644, %v766
      %v788 = vmul.f32 %v647, %v781
      %v789 = vld [vmem:[%s5] sm:$0xff]
      %v790 = vld [vmem:[%s5 + $0x8] sm:$0xff]
      %v791 = vld [vmem:[%s5 + $0x10] sm:$0xff]
      %v792 = vld [vmem:[%s5 + $0x18] sm:$0xff]
      %v793 = vld [vmem:[%s5 + $0x20] sm:$0xff]
      %v794 = vld [vmem:[%s5 + $0x28] sm:$0xff]
      %v795 = vld [vmem:[%s5 + $0x30] sm:$0xff]
      %v796 = vld [vmem:[%s5 + $0x38] sm:$0xff]
      %v797 = vld [vmem:[%s6] sm:$0x1]
      %v799 = vperm.slane %v797, 0
      %vm801 = vcmask 523264
      %v803 = vsel %vm801, %v782, 0
      %v806 = vsel %vm801, %v783, 0
      %v809 = vsel %vm801, %v784, 0
      %v812 = vsel %vm801, %v785, 0
      %v815 = vsel %vm801, %v786, 0
      %v818 = vsel %vm801, %v787, 0
      %v821 = vsel %vm801, %v788, 0
      %823 = vmatpush.msra.mxu0 0.0
      %824 = vmatpush.msra.mxu0 0.0
      %825 = vmatpush.msra.mxu0 0.0
      %826 = vmatpush.msra.mxu0 0.0
      %827 = vmatpush.msra.mxu0 0.0
      %828 = vmatpush.msra.mxu0 0.0
      %829 = vmatpush.msra.mxu0 0.0
      %830 = vmatpush.msra.mxu0 0.0
      %831 = vmatpush.msra.mxu0 %v796
      %832 = vmatpush.msra.mxu0 %v795
      %833 = vmatpush.msra.mxu0 %v794
      %834 = vmatpush.msra.mxu0 %v793
      %835 = vmatpush.msra.mxu0 %v792
      %836 = vmatpush.msra.mxu0 %v791
      %837 = vmatpush.msra.mxu0 %v790
      %838 = vmatpush.msra.mxu0 %v789
      %839 = vmatmul.f32.gmra.mxu0 %v803
      %v840 = vpop.f32.mrf.mxu0
      %v841 = vadd.f32 %v799, %v840
      %842 = vmatmul.f32.gmra.mxu0 %v806
      %v843 = vpop.f32.mrf.mxu0
      %v844 = vadd.f32 %v799, %v843
      %845 = vmatmul.f32.gmra.mxu0 %v809
      %v846 = vpop.f32.mrf.mxu0
      %v847 = vadd.f32 %v799, %v846
      %848 = vmatmul.f32.gmra.mxu0 %v812
      %v849 = vpop.f32.mrf.mxu0
      %v850 = vadd.f32 %v799, %v849
      %851 = vmatmul.f32.gmra.mxu0 %v815
      %v852 = vpop.f32.mrf.mxu0
      %v853 = vadd.f32 %v799, %v852
      %854 = vmatmul.f32.gmra.mxu0 %v818
      %v855 = vpop.f32.mrf.mxu0
      %v856 = vadd.f32 %v799, %v855
      %857 = vmatmul.f32.gmra.mxu0 %v821
      %v858 = vpop.f32.mrf.mxu0
      %v859 = vadd.f32 %v799, %v858
      %860 = vdwg.mxu0
      %v861 = vxor.u32 %v841, 2147483648
      %v862 = vxor.u32 %v844, 2147483648
      %v863 = vxor.u32 %v847, 2147483648
      %v864 = vxor.u32 %v850, 2147483648
      %v865 = vxor.u32 %v853, 2147483648
      %v866 = vxor.u32 %v856, 2147483648
      %v867 = vxor.u32 %v859, 2147483648
      %v868 = vmul.f32 %v861, 1.442695
      %v869 = vpow.pop %v868
      %v870 = vmul.f32 %v862, 1.442695
      %v871 = vpow.pop %v870
      %v872 = vmul.f32 %v863, 1.442695
      %v873 = vpow.pop %v872
      %v874 = vmul.f32 %v864, 1.442695
      %v875 = vpow.pop %v874
      %v876 = vmul.f32 %v865, 1.442695
      %v877 = vpow.pop %v876
      %v878 = vmul.f32 %v866, 1.442695
      %v879 = vpow.pop %v878
      %v880 = vmul.f32 %v867, 1.442695
      %v881 = vpow.pop %v880
      %v882 = vadd.f32 %v869, 1.0
      %v883 = vadd.f32 %v871, 1.0
      %v884 = vadd.f32 %v873, 1.0
      %v885 = vadd.f32 %v875, 1.0
      %v886 = vadd.f32 %v877, 1.0
      %v887 = vadd.f32 %v879, 1.0
      %v888 = vadd.f32 %v881, 1.0
      %v889 = vrcp.pop %v882
      %v890 = vmul.f32 %v882, %v889
      %v891 = vsub.f32 1.0, %v890
      %v892 = vmul.f32 %v889, %v891
      %v893 = vadd.f32 %v889, %v892
      %vm894 = vweird.f32 %v882
      %vm895 = vweird.f32 %v889
      %vm896 = vmor %vm894, %vm895
      %v897 = vsel %vm896, %v889, %v893
      %v898 = vand.u32 2147483647, %v882
      %vm899 = vcmp.eq.f32.partialorder %v898, 8.507059e+37
      %v900 = vand.u32 %v882, 2147483648
      %v901 = vor.u32 1.1754944e-38, %v900
      %v902 = vsel %vm899, %v901, %v897
      %v903 = vmul.f32 1.0, %v902
      %v904 = vrcp.pop %v883
      %v905 = vmul.f32 %v883, %v904
      %v906 = vsub.f32 1.0, %v905
      %v907 = vmul.f32 %v904, %v906
      %v908 = vadd.f32 %v904, %v907
      %vm909 = vweird.f32 %v883
      %vm910 = vweird.f32 %v904
      %vm911 = vmor %vm909, %vm910
      %v912 = vsel %vm911, %v904, %v908
      %v913 = vand.u32 2147483647, %v883
      %vm914 = vcmp.eq.f32.partialorder %v913, 8.507059e+37
      %v915 = vand.u32 %v883, 2147483648
      %v916 = vor.u32 1.1754944e-38, %v915
      %v917 = vsel %vm914, %v916, %v912
      %v918 = vmul.f32 1.0, %v917
      %v919 = vrcp.pop %v884
      %v920 = vmul.f32 %v884, %v919
      %v921 = vsub.f32 1.0, %v920
      %v922 = vmul.f32 %v919, %v921
      %v923 = vadd.f32 %v919, %v922
      %vm924 = vweird.f32 %v884
      %vm925 = vweird.f32 %v919
      %vm926 = vmor %vm924, %vm925
      %v927 = vsel %vm926, %v919, %v923
      %v928 = vand.u32 2147483647, %v884
      %vm929 = vcmp.eq.f32.partialorder %v928, 8.507059e+37
      %v930 = vand.u32 %v884, 2147483648
      %v931 = vor.u32 1.1754944e-38, %v930
      %v932 = vsel %vm929, %v931, %v927
      %v933 = vmul.f32 1.0, %v932
      %v934 = vrcp.pop %v885
      %v935 = vmul.f32 %v885, %v934
      %v936 = vsub.f32 1.0, %v935
      %v937 = vmul.f32 %v934, %v936
      %v938 = vadd.f32 %v934, %v937
      %vm939 = vweird.f32 %v885
      %vm940 = vweird.f32 %v934
      %vm941 = vmor %vm939, %vm940
      %v942 = vsel %vm941, %v934, %v938
      %v943 = vand.u32 2147483647, %v885
      %vm944 = vcmp.eq.f32.partialorder %v943, 8.507059e+37
      %v945 = vand.u32 %v885, 2147483648
      %v946 = vor.u32 1.1754944e-38, %v945
      %v947 = vsel %vm944, %v946, %v942
      %v948 = vmul.f32 1.0, %v947
      %v949 = vrcp.pop %v886
      %v950 = vmul.f32 %v886, %v949
      %v951 = vsub.f32 1.0, %v950
      %v952 = vmul.f32 %v949, %v951
      %v953 = vadd.f32 %v949, %v952
      %vm954 = vweird.f32 %v886
      %vm955 = vweird.f32 %v949
      %vm956 = vmor %vm954, %vm955
      %v957 = vsel %vm956, %v949, %v953
      %v958 = vand.u32 2147483647, %v886
      %vm959 = vcmp.eq.f32.partialorder %v958, 8.507059e+37
      %v960 = vand.u32 %v886, 2147483648
      %v961 = vor.u32 1.1754944e-38, %v960
      %v962 = vsel %vm959, %v961, %v957
      %v963 = vmul.f32 1.0, %v962
      %v964 = vrcp.pop %v887
      %v965 = vmul.f32 %v887, %v964
      %v966 = vsub.f32 1.0, %v965
      %v967 = vmul.f32 %v964, %v966
      %v968 = vadd.f32 %v964, %v967
      %vm969 = vweird.f32 %v887
      %vm970 = vweird.f32 %v964
      %vm971 = vmor %vm969, %vm970
      %v972 = vsel %vm971, %v964, %v968
      %v973 = vand.u32 2147483647, %v887
      %vm974 = vcmp.eq.f32.partialorder %v973, 8.507059e+37
      %v975 = vand.u32 %v887, 2147483648
      %v976 = vor.u32 1.1754944e-38, %v975
      %v977 = vsel %vm974, %v976, %v972
      %v978 = vmul.f32 1.0, %v977
      %v979 = vrcp.pop %v888
      %v980 = vmul.f32 %v888, %v979
      %v981 = vsub.f32 1.0, %v980
      %v982 = vmul.f32 %v979, %v981
      %v983 = vadd.f32 %v979, %v982
      %vm984 = vweird.f32 %v888
      %vm985 = vweird.f32 %v979
      %vm986 = vmor %vm984, %vm985
      %v987 = vsel %vm986, %v979, %v983
      %v988 = vand.u32 2147483647, %v888
      %vm989 = vcmp.eq.f32.partialorder %v988, 8.507059e+37
      %v990 = vand.u32 %v888, 2147483648
      %v991 = vor.u32 1.1754944e-38, %v990
      %v992 = vsel %vm989, %v991, %v987
      %v993 = vmul.f32 1.0, %v992
      %v994 = vmul.f32 %v841, %v903
      %v995 = vmul.f32 %v844, %v918
      %v996 = vmul.f32 %v847, %v933
      %v997 = vmul.f32 %v850, %v948
      %v998 = vmul.f32 %v853, %v963
      %v999 = vmul.f32 %v856, %v978
      %v1000 = vmul.f32 %v859, %v993
      %v1001 = vld [vmem:[%s7] sm:$0xff]
      %v1002 = vld [vmem:[%s7 + $0x8] sm:$0xff]
      %v1003 = vld [vmem:[%s7 + $0x10] sm:$0xff]
      %v1004 = vld [vmem:[%s7 + $0x18] sm:$0xff]
      %v1005 = vld [vmem:[%s8] sm:$0x1]
      %v1007 = vperm.slane %v1005, 0
      %vm1009 = vcmask 261120
      %v1011 = vsel %vm1009, %v994, 0
      %v1014 = vsel %vm1009, %v995, 0
      %v1017 = vsel %vm1009, %v996, 0
      %v1020 = vsel %vm1009, %v997, 0
      %v1023 = vsel %vm1009, %v998, 0
      %v1026 = vsel %vm1009, %v999, 0
      %v1029 = vsel %vm1009, %v1000, 0
      %1031 = vmatpush.msra.mxu0 0.0
      %1032 = vmatpush.msra.mxu0 0.0
      %1033 = vmatpush.msra.mxu0 0.0
      %1034 = vmatpush.msra.mxu0 0.0
      %1035 = vmatpush.msra.mxu0 0.0
      %1036 = vmatpush.msra.mxu0 0.0
      %1037 = vmatpush.msra.mxu0 0.0
      %1038 = vmatpush.msra.mxu0 0.0
      %1039 = vmatpush.msra.mxu0 0.0
      %1040 = vmatpush.msra.mxu0 0.0
      %1041 = vmatpush.msra.mxu0 0.0
      %1042 = vmatpush.msra.mxu0 0.0
      %1043 = vmatpush.msra.mxu0 %v1004
      %1044 = vmatpush.msra.mxu0 %v1003
      %1045 = vmatpush.msra.mxu0 %v1002
      %1046 = vmatpush.msra.mxu0 %v1001
      %1047 = vmatmul.f32.gmra.mxu0 %v1011
      %v1048 = vpop.f32.mrf.mxu0
      %v1049 = vadd.f32 %v1007, %v1048
      %1050 = vmatmul.f32.gmra.mxu0 %v1014
      %v1051 = vpop.f32.mrf.mxu0
      %v1052 = vadd.f32 %v1007, %v1051
      %1053 = vmatmul.f32.gmra.mxu0 %v1017
      %v1054 = vpop.f32.mrf.mxu0
      %v1055 = vadd.f32 %v1007, %v1054
      %1056 = vmatmul.f32.gmra.mxu0 %v1020
      %v1057 = vpop.f32.mrf.mxu0
      %v1058 = vadd.f32 %v1007, %v1057
      %1059 = vmatmul.f32.gmra.mxu0 %v1023
      %v1060 = vpop.f32.mrf.mxu0
      %v1061 = vadd.f32 %v1007, %v1060
      %1062 = vmatmul.f32.gmra.mxu0 %v1026
      %v1063 = vpop.f32.mrf.mxu0
      %v1064 = vadd.f32 %v1007, %v1063
      %1065 = vmatmul.f32.gmra.mxu0 %v1029
      %v1066 = vpop.f32.mrf.mxu0
      %v1067 = vadd.f32 %v1007, %v1066
      %1068 = vdwg.mxu0
      %v1069 = vxor.u32 %v431, 2147483648
      %v1070 = vxor.u32 %v434, 2147483648
      %v1071 = vxor.u32 %v437, 2147483648
      %v1072 = vxor.u32 %v440, 2147483648
      %v1073 = vxor.u32 %v443, 2147483648
      %v1074 = vxor.u32 %v446, 2147483648
      %v1075 = vxor.u32 %v449, 2147483648
      %v1076 = vmul.f32 %v1069, 1.442695
      %v1077 = vpow.pop %v1076
      %v1078 = vmul.f32 %v1070, 1.442695
      %v1079 = vpow.pop %v1078
      %v1080 = vmul.f32 %v1071, 1.442695
      %v1081 = vpow.pop %v1080
      %v1082 = vmul.f32 %v1072, 1.442695
      %v1083 = vpow.pop %v1082
      %v1084 = vmul.f32 %v1073, 1.442695
      %v1085 = vpow.pop %v1084
      %v1086 = vmul.f32 %v1074, 1.442695
      %v1087 = vpow.pop %v1086
      %v1088 = vmul.f32 %v1075, 1.442695
      %v1089 = vpow.pop %v1088
      %v1090 = vadd.f32 %v1077, 1.0
      %v1091 = vadd.f32 %v1079, 1.0
      %v1092 = vadd.f32 %v1081, 1.0
      %v1093 = vadd.f32 %v1083, 1.0
      %v1094 = vadd.f32 %v1085, 1.0
      %v1095 = vadd.f32 %v1087, 1.0
      %v1096 = vadd.f32 %v1089, 1.0
      %v1097 = vrcp.pop %v1090
      %v1098 = vmul.f32 %v1090, %v1097
      %v1099 = vsub.f32 1.0, %v1098
      %v1100 = vmul.f32 %v1097, %v1099
      %v1101 = vadd.f32 %v1097, %v1100
      %vm1102 = vweird.f32 %v1090
      %vm1103 = vweird.f32 %v1097
      %vm1104 = vmor %vm1102, %vm1103
      %v1105 = vsel %vm1104, %v1097, %v1101
      %v1106 = vand.u32 2147483647, %v1090
      %vm1107 = vcmp.eq.f32.partialorder %v1106, 8.507059e+37
      %v1108 = vand.u32 %v1090, 2147483648
      %v1109 = vor.u32 1.1754944e-38, %v1108
      %v1110 = vsel %vm1107, %v1109, %v1105
      %v1111 = vmul.f32 1.0, %v1110
      %v1112 = vrcp.pop %v1091
      %v1113 = vmul.f32 %v1091, %v1112
      %v1114 = vsub.f32 1.0, %v1113
      %v1115 = vmul.f32 %v1112, %v1114
      %v1116 = vadd.f32 %v1112, %v1115
      %vm1117 = vweird.f32 %v1091
      %vm1118 = vweird.f32 %v1112
      %vm1119 = vmor %vm1117, %vm1118
      %v1120 = vsel %vm1119, %v1112, %v1116
      %v1121 = vand.u32 2147483647, %v1091
      %vm1122 = vcmp.eq.f32.partialorder %v1121, 8.507059e+37
      %v1123 = vand.u32 %v1091, 2147483648
      %v1124 = vor.u32 1.1754944e-38, %v1123
      %v1125 = vsel %vm1122, %v1124, %v1120
      %v1126 = vmul.f32 1.0, %v1125
      %v1127 = vrcp.pop %v1092
      %v1128 = vmul.f32 %v1092, %v1127
      %v1129 = vsub.f32 1.0, %v1128
      %v1130 = vmul.f32 %v1127, %v1129
      %v1131 = vadd.f32 %v1127, %v1130
      %vm1132 = vweird.f32 %v1092
      %vm1133 = vweird.f32 %v1127
      %vm1134 = vmor %vm1132, %vm1133
      %v1135 = vsel %vm1134, %v1127, %v1131
      %v1136 = vand.u32 2147483647, %v1092
      %vm1137 = vcmp.eq.f32.partialorder %v1136, 8.507059e+37
      %v1138 = vand.u32 %v1092, 2147483648
      %v1139 = vor.u32 1.1754944e-38, %v1138
      %v1140 = vsel %vm1137, %v1139, %v1135
      %v1141 = vmul.f32 1.0, %v1140
      %v1142 = vrcp.pop %v1093
      %v1143 = vmul.f32 %v1093, %v1142
      %v1144 = vsub.f32 1.0, %v1143
      %v1145 = vmul.f32 %v1142, %v1144
      %v1146 = vadd.f32 %v1142, %v1145
      %vm1147 = vweird.f32 %v1093
      %vm1148 = vweird.f32 %v1142
      %vm1149 = vmor %vm1147, %vm1148
      %v1150 = vsel %vm1149, %v1142, %v1146
      %v1151 = vand.u32 2147483647, %v1093
      %vm1152 = vcmp.eq.f32.partialorder %v1151, 8.507059e+37
      %v1153 = vand.u32 %v1093, 2147483648
      %v1154 = vor.u32 1.1754944e-38, %v1153
      %v1155 = vsel %vm1152, %v1154, %v1150
      %v1156 = vmul.f32 1.0, %v1155
      %v1157 = vrcp.pop %v1094
      %v1158 = vmul.f32 %v1094, %v1157
      %v1159 = vsub.f32 1.0, %v1158
      %v1160 = vmul.f32 %v1157, %v1159
      %v1161 = vadd.f32 %v1157, %v1160
      %vm1162 = vweird.f32 %v1094
      %vm1163 = vweird.f32 %v1157
      %vm1164 = vmor %vm1162, %vm1163
      %v1165 = vsel %vm1164, %v1157, %v1161
      %v1166 = vand.u32 2147483647, %v1094
      %vm1167 = vcmp.eq.f32.partialorder %v1166, 8.507059e+37
      %v1168 = vand.u32 %v1094, 2147483648
      %v1169 = vor.u32 1.1754944e-38, %v1168
      %v1170 = vsel %vm1167, %v1169, %v1165
      %v1171 = vmul.f32 1.0, %v1170
      %v1172 = vrcp.pop %v1095
      %v1173 = vmul.f32 %v1095, %v1172
      %v1174 = vsub.f32 1.0, %v1173
      %v1175 = vmul.f32 %v1172, %v1174
      %v1176 = vadd.f32 %v1172, %v1175
      %vm1177 = vweird.f32 %v1095
      %vm1178 = vweird.f32 %v1172
      %vm1179 = vmor %vm1177, %vm1178
      %v1180 = vsel %vm1179, %v1172, %v1176
      %v1181 = vand.u32 2147483647, %v1095
      %vm1182 = vcmp.eq.f32.partialorder %v1181, 8.507059e+37
      %v1183 = vand.u32 %v1095, 2147483648
      %v1184 = vor.u32 1.1754944e-38, %v1183
      %v1185 = vsel %vm1182, %v1184, %v1180
      %v1186 = vmul.f32 1.0, %v1185
      %v1187 = vrcp.pop %v1096
      %v1188 = vmul.f32 %v1096, %v1187
      %v1189 = vsub.f32 1.0, %v1188
      %v1190 = vmul.f32 %v1187, %v1189
      %v1191 = vadd.f32 %v1187, %v1190
      %vm1192 = vweird.f32 %v1096
      %vm1193 = vweird.f32 %v1187
      %vm1194 = vmor %vm1192, %vm1193
      %v1195 = vsel %vm1194, %v1187, %v1191
      %v1196 = vand.u32 2147483647, %v1096
      %vm1197 = vcmp.eq.f32.partialorder %v1196, 8.507059e+37
      %v1198 = vand.u32 %v1096, 2147483648
      %v1199 = vor.u32 1.1754944e-38, %v1198
      %v1200 = vsel %vm1197, %v1199, %v1195
      %v1201 = vmul.f32 1.0, %v1200
      %v1202 = vadd.f32 %v1111, 1.0
      %v1203 = vadd.f32 %v1126, 1.0
      %v1204 = vadd.f32 %v1141, 1.0
      %v1205 = vadd.f32 %v1156, 1.0
      %v1206 = vadd.f32 %v1171, 1.0
      %v1207 = vadd.f32 %v1186, 1.0
      %v1208 = vadd.f32 %v1201, 1.0
      %v1209 = vmul.f32 %v1049, %v1202
      %v1210 = vmul.f32 %v1052, %v1203
      %v1211 = vmul.f32 %v1055, %v1204
      %v1212 = vmul.f32 %v1058, %v1205
      %v1213 = vmul.f32 %v1061, %v1206
      %v1214 = vmul.f32 %v1064, %v1207
      %v1215 = vmul.f32 %v1067, %v1208
      %vm1216 = vcmask 39936
      %1217 = vst.msk [vmem:[%s334] sm:$0xff] %vm1216, %v1209
      %1218 = vst.msk [vmem:[%s334 + $0x8] sm:$0xff] %vm1216, %v1210
      %1219 = vst.msk [vmem:[%s334 + $0x10] sm:$0xff] %vm1216, %v1211
      %1220 = vst.msk [vmem:[%s334 + $0x18] sm:$0xff] %vm1216, %v1212
      %1221 = vst.msk [vmem:[%s334 + $0x20] sm:$0xff] %vm1216, %v1213
      %1222 = vst.msk [vmem:[%s334 + $0x28] sm:$0xff] %vm1216, %v1214
      %1223 = vst.msk [vmem:[%s334 + $0x30] sm:$0xff] %vm1216, %v1215
      %s1224 = smul.u32 7, %s20
      %p1225 = scmp.lt.s32.totalorder %s1224, 13
      %s1226 = scalar_select %p1225, %s1224, 13
      %s1227 = smul.addr %s1226, 8
      %s1228 = scalar_lea.vmem %s9, %s1227
      // Predicated region
      $region57: #{tpu_custom_call.1} parent=55 // pred_check
        %p1229 = pneg %p232
      $region58: #{tpu_custom_call.1} parent=55 // pred_check_branch
        %1231 = sbr.rel (%p1229) target = $region60
      $region59: #{tpu_custom_call.1} parent=55 // pred_region
        %s1232 = smul.u32 7, %s20
      $region60: #{tpu_custom_call.1} parent=55 // pred_fallthru
        _
    $region56: #{tpu_custom_call.1} parent=5 // pred_fallthru
      _
    %p1233 = scmp.le.s32.totalorder 2, %s15
    // Predicated region
    $region61: #{tpu_custom_call.1} parent=5 // pred_check
      %p1234 = pneg %p1233
    $region62: #{tpu_custom_call.1} parent=5 // pred_check_branch
      %1236 = sbr.rel (%p1234) target = $region64
    $region63: #{tpu_custom_call.1} parent=5 // pred_region
      %s1237 = ssub.s32 %s15, 2
      // Predicated region
      $region65: #{tpu_custom_call.1} parent=63 // pred_check
        %p1238 = pneg %p238
      $region66: #{tpu_custom_call.1} parent=63 // pred_check_branch
        %1240 = sbr.rel (%p1238) target = $region68
      $region67: #{tpu_custom_call.1} parent=63 // pred_region
        %s1241 = smul.u32 7, %s21
        %p1242 = scmp.lt.s32.totalorder %s1241, 13
        %s1243 = scalar_select %p1242, %s1241, 13
        %s1244 = smul.addr %s1243, 8
        %s1245 = scalar_lea.vmem %s9, %s1244
      $region68: #{tpu_custom_call.1} parent=63 // pred_fallthru
        _
    $region64: #{tpu_custom_call.1} parent=5 // pred_fallthru
      _
  $region6: #{tpu_custom_call.1} parent=0 // loop_footer
    %s19 = sadd.s32 1, %s15
  $region7: #{tpu_custom_call.1} parent=0 // loop_footer_branch
    %14 = sbr.rel target = $region3
  $region8: #{tpu_custom_call.1} parent=0 // loop_exit
    _

</llo_original>
